<compile_context>
chip_gen: v5e
topology: v5e:2x2
jax: 0.10.0
libtpu: 0.0.40
codegen_flags: <defaults>
</compile_context>

<pallas_src>
import jax
import jax.numpy as jnp
from jax import lax
from jax.experimental import pallas as pl
from jax.experimental.pallas import tpu as pltpu


# ----------------------------- Pallas kernel ------------------------------- #
def _make_flux_kernel(*, Nx, Ny, TM, a, b, dval0, dval1, nval2, nval3):
    """Flux kernel for one (1, TM, Ny) row-tile of one batch element.

    a = stencil[0] * D_eff, b = stencil[1] * D_eff (compile-time constants)
    dval0/dval1 : Dirichlet values for left/right (axis-0) global boundaries
    nval2/nval3 : Neumann values for top/bottom (axis-1) global boundaries
    """
    a = float(a)
    b = float(b)
    dval0 = float(dval0)
    dval1 = float(dval1)
    nval2 = float(nval2)
    nval3 = float(nval3)

    def kernel(u_ref, u_hbm_ref, out_ref, halo_ref, sem_ref):
        bi = pl.program_id(0)              # batch index       ("parallel")
        ri = pl.program_id(1)              # row-tile index    ("arbitrary")
        n_row_tiles = pl.num_programs(1)
        row0 = ri * TM                     # global row offset of this tile

        # ---- kick off single-row halo DMAs: previous tile's last row and
        #      next tile's first row (only when those tiles exist).
        @pl.when(ri > 0)
        def _():
            pltpu.make_async_copy(
                u_hbm_ref.at[bi, pl.ds(row0 - 1, 1)], halo_ref.at[0],
                sem_ref.at[0]).start()

        @pl.when(ri < n_row_tiles - 1)
        def _():
            pltpu.make_async_copy(
                u_hbm_ref.at[bi, pl.ds(row0 + TM, 1)], halo_ref.at[1],
                sem_ref.at[1]).start()

        # ---- lane-direction (Ny / Neumann) fluxes first: overlaps with the
        #      in-flight halo DMAs; masks computed once, iotas dropped, one
        #      running accumulator keeps vreg pressure low.
        u = u_ref[0].astype(jnp.float32)               # (TM, Ny)
        bu = b * u                                     # shared s1*D*u term

        col = lax.broadcasted_iota(jnp.int32, (TM, Ny), 1)
        m_c_first = col == 0
        m_c_last = col == Ny - 1

        u_jm1 = pltpu.roll(u, shift=1, axis=1)         # u[:, j-1]
        acc = jnp.where(m_c_first, nval2, a * u_jm1 + bu)
        u_jp1 = pltpu.roll(u, shift=Ny - 1, axis=1)    # u[:, j+1]
        acc = acc + jnp.where(m_c_last, nval3, a * u_jp1 + bu)

        # ---- row-direction (Nx / Dirichlet) fluxes: wait for halos, patch
        #      tile edges with true neighbor rows, then patch global
        #      boundaries with the Dirichlet values.
        row = lax.broadcasted_iota(jnp.int32, (TM, Ny), 0)
        m_r_first = row == 0                           # tile-local top row
        m_r_last = row == TM - 1                       # tile-local bottom row
        g_row = row + row0
        m_g_first = g_row == 0                         # global boundary rows
        m_g_last = g_row == Nx - 1

        @pl.when(ri > 0)
        def _():
            pltpu.make_async_copy(
                u_hbm_ref.at[bi, pl.ds(row0 - 1, 1)], halo_ref.at[0],
                sem_ref.at[0]).wait()

        @pl.when(ri < n_row_tiles - 1)
        def _():
            pltpu.make_async_copy(
                u_hbm_ref.at[bi, pl.ds(row0 + TM, 1)], halo_ref.at[1],
                sem_ref.at[1]).wait()

        # roll wraps *within* the tile; tile edges are overridden by the halo
        # rows (interior tile boundaries) or the Dirichlet constants (global).
        u_im1 = pltpu.roll(u, shift=1, axis=0)         # u[i-1, :]
        u_im1 = jnp.where(m_r_first, halo_ref[0].astype(jnp.float32), u_im1)
        u_im1 = jnp.where(m_g_first, dval0, u_im1)

        u_ip1 = pltpu.roll(u, shift=TM - 1, axis=0)    # u[i+1, :]
        u_ip1 = jnp.where(m_r_last, halo_ref[1].astype(jnp.float32), u_ip1)
        u_ip1 = jnp.where(m_g_last, dval1, u_ip1)

        acc = acc + (a * (u_im1 + u_ip1) + (bu + bu))
        out_ref[0] = acc.astype(out_ref.dtype)         # single lane-dense store

    return kernel


def _build_flux_call(*, B, Nx, Ny, TM, in_dtype,
                     a, b, dval0, dval1, nval2, nval3):
    n_row_tiles = pl.cdiv(Nx, TM)
    kernel = _make_flux_kernel(Nx=Nx, Ny=Ny, TM=TM, a=a, b=b,
                               dval0=dval0, dval1=dval1,
                               nval2=nval2, nval3=nval3)
    return pl.pallas_call(
        kernel,
        out_shape=jax.ShapeDtypeStruct((B, Nx, Ny), jnp.float32),
        grid_spec=pltpu.PrefetchScalarGridSpec(
            num_scalar_prefetch=0,
            grid=(B, n_row_tiles),
            in_specs=[
                pl.BlockSpec((1, TM, Ny), lambda bb, ii: (bb, ii, 0)),
                pl.BlockSpec(memory_space=pl.ANY),   # raw HBM view for halo DMA
            ],
            out_specs=pl.BlockSpec((1, TM, Ny), lambda bb, ii: (bb, ii, 0)),
            scratch_shapes=[
                pltpu.VMEM((2, 1, Ny), in_dtype),    # [prev-row, next-row] halo
                pltpu.SemaphoreType.DMA((2,)),
            ],
        ),
        compiler_params=pltpu.CompilerParams(
            dimension_semantics=("parallel", "arbitrary"),
        ),
    )


# ------------------------------ JAX wrapper -------------------------------- #
class FluxKernelsPallas:
    """JAX/Pallas port of Flux_Kernels with a fixed synthetic configuration."""

    def __init__(self, u0, block_rows=None):
        self.Nx, self.Ny = u0.shape
        self.u0 = u0
        # Deterministic "parameters" (module __init__ shapes, no checkpoint):
        self.stencil = jnp.array([1.0, -1.0], dtype=jnp.float32)         # [2]
        self.D_eff = jnp.array([0.5], dtype=jnp.float32)                 # [1]
        self.dirichlet_val = jnp.array([1.0, 0.25, 0.0, 0.0],
                                       dtype=jnp.float32)                # [4]
        self.neumann_val = jnp.array([0.0, 0.0, 0.125, -0.125],
                                     dtype=jnp.float32)                  # [4]
        self.is_retardation_a_func = False
        # TODO(synk): cauchy boundary path (stateful cauchy_val update) and
        #   ret_inv_fun (an external nn module) are not modelled in this kernel.
        # TODO(synk): learn_stencil / learn_coeff would need stencil & D_eff as
        #   SMEM scalar inputs instead of baked compile-time constants.

        if block_rows is None:
            block_rows = min(self.Nx, 512)   # >=512-row tiles ~ HBM roofline
        if block_rows != self.Nx:
            assert block_rows % 8 == 0, "block_rows must be a multiple of 8"
        self.block_rows = block_rows

        s0, s1, d_eff = 1.0, -1.0, 0.5
        self._consts = dict(a=s0 * d_eff, b=s1 * d_eff,
                            dval0=1.0, dval1=0.25, nval2=0.125, nval3=-0.125)
        self._calls = {}   # (batch, dtype) -> compiled pallas_call

    def _get_call(self, batch, dtype):
        key = (int(batch), jnp.dtype(dtype).name)
        if key not in self._calls:
            self._calls[key] = _build_flux_call(
                B=int(batch), Nx=self.Nx, Ny=self.Ny, TM=self.block_rows,
                in_dtype=jnp.dtype(dtype), **self._consts)
        return self._calls[key]

    def __call__(self, u_main, u_coupled, t):
        # u_main: [1, Nx, Ny] -> flux [Nx, Ny]   (matches the PyTorch forward)
        del u_coupled, t   # only used by retardation-function / cauchy paths
        call = self._get_call(u_main.shape[0], u_main.dtype)
        # u_main is passed twice: once auto-tiled into VMEM, once as a raw HBM
        # ref for the single-row halo DMAs.
        return call(u_main, u_main)[0]

    def flux_batched(self, u_batch):
        """Flux for B independent fields in ONE pallas_call (amortizes the
        per-call launch/DMA overhead; the batch grid axis is 'parallel' so it
        shards across both TensorCores on v7x)."""
        call = self._get_call(u_batch.shape[0], u_batch.dtype)
        return call(u_batch, u_batch)


# ------------------------- pure-JAX reference ------------------------------- #
def flux_reference(u_main, stencil, D_eff, dval, nval):
    u = jnp.squeeze(u_main, axis=0).astype(jnp.float32)
    Nx, Ny = u.shape
    ret = jnp.ones((Nx, Ny), jnp.float32)
    s0, s1, D = stencil[0], stencil[1], D_eff[0]

    left_bnd = ((s0 * dval[0] + s1 * u[0, :])[None, :] * D * ret[0, :])
    left_nei = (s0 * u[:-1, :] + s1 * u[1:, :]) * D * ret[1:, :]
    left = jnp.concatenate([left_bnd, left_nei], axis=0)

    right_bnd = ((s0 * dval[1] + s1 * u[-1, :])[None, :] * D * ret[-1, :])
    right_nei = (s0 * u[1:, :] + s1 * u[:-1, :]) * D * ret[:-1, :]
    right = jnp.concatenate([right_nei, right_bnd], axis=0)

    top_bnd = jnp.full((Nx, 1), nval[2], jnp.float32)
    top_nei = (s0 * u[:, :-1] + s1 * u[:, 1:]) * D * ret[:, 1:]
    top = jnp.concatenate([top_bnd, top_nei], axis=1)

    bot_bnd = jnp.full((Nx, 1), nval[3], jnp.float32)
    bot_nei = (s0 * u[:, 1:] + s1 * u[:, :-1]) * D * ret[:, :-1]
    bot = jnp.concatenate([bot_nei, bot_bnd], axis=1)

    return left + right + top + bot


# --------------------------------- main ------------------------------------ #
if __name__ == "__main__":
    Nx, Ny = 32, 128   # lane-aligned grid; Nx=sublanes, Ny=lanes

    key = jax.random.PRNGKey(0)
    k0, k1, k2, k3 = jax.random.split(key, 4)
    u0 = jax.random.uniform(k0, (Nx, Ny), dtype=jnp.float32)
    u_main = jax.random.uniform(k1, (1, Nx, Ny), dtype=jnp.float32)
    u_coupled = jax.random.uniform(k2, (1, Nx, Ny), dtype=jnp.float32)
    t = 0.0

    # block_rows=16 < Nx so the row-tiled path (with halo-row DMAs across the
    # internal tile boundary) is actually exercised at this small size.
    mod = FluxKernelsPallas(u0, block_rows=16)

    # --- module forward (single field, matches PyTorch semantics) -----------
    flux = jax.block_until_ready(mod(u_main, u_coupled, t))
    ref = flux_reference(u_main, mod.stencil, mod.D_eff,
                         mod.dirichlet_val, mod.neumann_val)
    assert flux.shape == (Nx, Ny)
    assert jnp.allclose(flux, ref, atol=1e-5, rtol=1e-5), (
        float(jnp.max(jnp.abs(flux - ref))))

    # --- batched path: B independent fields in one launch -------------------
    u_batch = jax.random.uniform(k3, (2, Nx, Ny), dtype=jnp.float32)
    flux_b = jax.block_until_ready(mod.flux_batched(u_batch))
    assert flux_b.shape == (2, Nx, Ny)
    for bidx in range(2):
        ref_b = flux_reference(u_batch[bidx:bidx + 1], mod.stencil, mod.D_eff,
                               mod.dirichlet_val, mod.neumann_val)
        assert jnp.allclose(flux_b[bidx], ref_b, atol=1e-5, rtol=1e-5), (
            bidx, float(jnp.max(jnp.abs(flux_b[bidx] - ref_b))))

    print("KERNEL_OK")
</pallas_src>

<mosaic_0001>
module attributes {stable_mosaic.version = 11 : i64} {
  func.func @kernel(%arg0: i32, %arg1: i32, %arg2: memref<1x16x128xf32, #tpu.memory_space<vmem>>, %arg3: memref<1x32x128xf32, #tpu.memory_space<any>>, %arg4: memref<1x16x128xf32, #tpu.memory_space<vmem>>, %arg5: memref<2x1x128xf32, #tpu.memory_space<vmem>>, %arg6: memref<2x!tpu.dma_semaphore, #tpu.memory_space<semaphore_mem>>) attributes {dimension_semantics = [#tpu.dimension_semantics<parallel>, #tpu.dimension_semantics<arbitrary>], iteration_bounds = array<i64: 1, 2>, scalar_prefetch = 0 : i64, scratch_operands = 2 : i64, tpu.core_type = #tpu.core_type<tc>, window_params = [{transform_indices = @transform_0, window_bounds = array<i64: 1, 16, 128>}, {}, {transform_indices = @transform_2, window_bounds = array<i64: 1, 16, 128>}]} {
    %c16_i32 = arith.constant 16 : i32
    %0 = arith.muli %arg1, %c16_i32 : i32
    %c0_i32 = arith.constant 0 : i32
    %1 = arith.cmpi sgt, %arg1, %c0_i32 : i32
    %2 = arith.extui %1 : i1 to i32
    %c0_i32_0 = arith.constant 0 : i32
    %3 = arith.cmpi ne, %2, %c0_i32_0 : i32
    scf.if %3 {
      %c1_i32_30 = arith.constant 1 : i32
      %71 = arith.subi %0, %c1_i32_30 : i32
      %c0_i32_31 = arith.constant 0 : i32
      %c0_i32_32 = arith.constant 0 : i32
      %c0_i32_33 = arith.constant 0 : i32
      %72 = tpu.memref_slice %arg3[%arg0, %71, %c0_i32_33] : memref<1x32x128xf32, #tpu.memory_space<any>> -> memref<1x1x128xf32, #tpu.memory_space<any>>
      %73 = tpu.memref_squeeze %72 : memref<1x1x128xf32, #tpu.memory_space<any>> -> memref<1x128xf32, #tpu.memory_space<any>>
      %c0_i32_34 = arith.constant 0 : i32
      %c0_i32_35 = arith.constant 0 : i32
      %74 = tpu.memref_slice %arg5[%c0_i32_31, %c0_i32_34, %c0_i32_35] : memref<2x1x128xf32, #tpu.memory_space<vmem>> -> memref<1x1x128xf32, #tpu.memory_space<vmem>>
      %75 = tpu.memref_squeeze %74 : memref<1x1x128xf32, #tpu.memory_space<vmem>> -> memref<1x128xf32, #tpu.memory_space<vmem>>
      %76 = tpu.memref_slice %arg6[%c0_i32_32] : memref<2x!tpu.dma_semaphore, #tpu.memory_space<semaphore_mem>> -> memref<1x!tpu.dma_semaphore, #tpu.memory_space<semaphore_mem>>
      %77 = tpu.memref_squeeze %76 : memref<1x!tpu.dma_semaphore, #tpu.memory_space<semaphore_mem>> -> memref<!tpu.dma_semaphore, #tpu.memory_space<semaphore_mem>>
      tpu.enqueue_dma source(%73 : memref<1x128xf32, #tpu.memory_space<any>>) target(%75 : memref<1x128xf32, #tpu.memory_space<vmem>>) target_semaphore(%77 : memref<!tpu.dma_semaphore, #tpu.memory_space<semaphore_mem>>)
    } else {
    }
    %c1_i32 = arith.constant 1 : i32
    %4 = arith.cmpi slt, %arg1, %c1_i32 : i32
    %5 = arith.extui %4 : i1 to i32
    %c0_i32_1 = arith.constant 0 : i32
    %6 = arith.cmpi ne, %5, %c0_i32_1 : i32
    scf.if %6 {
      %c16_i32_30 = arith.constant 16 : i32
      %71 = arith.addi %0, %c16_i32_30 : i32
      %c1_i32_31 = arith.constant 1 : i32
      %c1_i32_32 = arith.constant 1 : i32
      %c0_i32_33 = arith.constant 0 : i32
      %72 = tpu.memref_slice %arg3[%arg0, %71, %c0_i32_33] : memref<1x32x128xf32, #tpu.memory_space<any>> -> memref<1x1x128xf32, #tpu.memory_space<any>>
      %73 = tpu.memref_squeeze %72 : memref<1x1x128xf32, #tpu.memory_space<any>> -> memref<1x128xf32, #tpu.memory_space<any>>
      %c0_i32_34 = arith.constant 0 : i32
      %c0_i32_35 = arith.constant 0 : i32
      %74 = tpu.memref_slice %arg5[%c1_i32_31, %c0_i32_34, %c0_i32_35] : memref<2x1x128xf32, #tpu.memory_space<vmem>> -> memref<1x1x128xf32, #tpu.memory_space<vmem>>
      %75 = tpu.memref_squeeze %74 : memref<1x1x128xf32, #tpu.memory_space<vmem>> -> memref<1x128xf32, #tpu.memory_space<vmem>>
      %76 = tpu.memref_slice %arg6[%c1_i32_32] : memref<2x!tpu.dma_semaphore, #tpu.memory_space<semaphore_mem>> -> memref<1x!tpu.dma_semaphore, #tpu.memory_space<semaphore_mem>>
      %77 = tpu.memref_squeeze %76 : memref<1x!tpu.dma_semaphore, #tpu.memory_space<semaphore_mem>> -> memref<!tpu.dma_semaphore, #tpu.memory_space<semaphore_mem>>
      tpu.enqueue_dma source(%73 : memref<1x128xf32, #tpu.memory_space<any>>) target(%75 : memref<1x128xf32, #tpu.memory_space<vmem>>) target_semaphore(%77 : memref<!tpu.dma_semaphore, #tpu.memory_space<semaphore_mem>>)
    } else {
    }
    %c0 = arith.constant 0 : index
    %c0_2 = arith.constant 0 : index
    %c0_3 = arith.constant 0 : index
    %7 = vector.load %arg2[%c0, %c0_2, %c0_3] : memref<1x16x128xf32, #tpu.memory_space<vmem>>, vector<1x16x128xf32>
    %8 = vector.shape_cast %7 : vector<1x16x128xf32> to vector<16x128xf32>
    %cst = arith.constant -5.000000e-01 : f32
    %9 = vector.broadcast %cst : f32 to vector<16x128xf32>
    %10 = arith.mulf %9, %8 : vector<16x128xf32>
    %11 = tpu.iota {dimensions = array<i32: 1>} : vector<16x128xi32>
    %c0_i32_4 = arith.constant 0 : i32
    %12 = vector.broadcast %c0_i32_4 : i32 to vector<16x128xi32>
    %13 = arith.cmpi eq, %11, %12 : vector<16x128xi32>
    %c127_i32 = arith.constant 127 : i32
    %14 = vector.broadcast %c127_i32 : i32 to vector<16x128xi32>
    %15 = arith.cmpi eq, %11, %14 : vector<16x128xi32>
    %c1_i32_5 = arith.constant 1 : i32
    %16 = tpu.dynamic_rotate %8 by %c1_i32_5 dim 1 : vector<16x128xf32>, i32 -> vector<16x128xf32>
    %cst_6 = arith.constant 5.000000e-01 : f32
    %17 = vector.broadcast %cst_6 : f32 to vector<16x128xf32>
    %18 = arith.mulf %17, %16 : vector<16x128xf32>
    %19 = arith.addf %18, %10 : vector<16x128xf32>
    %cst_7 = arith.constant 1.250000e-01 : f32
    %20 = vector.broadcast %cst_7 : f32 to vector<16x128xf32>
    %21 = arith.select %13, %20, %19 : vector<16x128xi1>, vector<16x128xf32>
    %c127_i32_8 = arith.constant 127 : i32
    %22 = tpu.dynamic_rotate %8 by %c127_i32_8 dim 1 : vector<16x128xf32>, i32 -> vector<16x128xf32>
    %cst_9 = arith.constant 5.000000e-01 : f32
    %23 = vector.broadcast %cst_9 : f32 to vector<16x128xf32>
    %24 = arith.mulf %23, %22 : vector<16x128xf32>
    %25 = arith.addf %24, %10 : vector<16x128xf32>
    %cst_10 = arith.constant -1.250000e-01 : f32
    %26 = vector.broadcast %cst_10 : f32 to vector<16x128xf32>
    %27 = arith.select %15, %26, %25 : vector<16x128xi1>, vector<16x128xf32>
    %28 = arith.addf %21, %27 : vector<16x128xf32>
    %29 = tpu.iota {dimensions = array<i32: 0>} : vector<16x128xi32>
    %c0_i32_11 = arith.constant 0 : i32
    %30 = vector.broadcast %c0_i32_11 : i32 to vector<16x128xi32>
    %31 = arith.cmpi eq, %29, %30 : vector<16x128xi32>
    %c15_i32 = arith.constant 15 : i32
    %32 = vector.broadcast %c15_i32 : i32 to vector<16x128xi32>
    %33 = arith.cmpi eq, %29, %32 : vector<16x128xi32>
    %34 = vector.broadcast %0 : i32 to vector<16x128xi32>
    %35 = arith.addi %29, %34 : vector<16x128xi32>
    %c0_i32_12 = arith.constant 0 : i32
    %36 = vector.broadcast %c0_i32_12 : i32 to vector<16x128xi32>
    %37 = arith.cmpi eq, %35, %36 : vector<16x128xi32>
    %c31_i32 = arith.constant 31 : i32
    %38 = vector.broadcast %c31_i32 : i32 to vector<16x128xi32>
    %39 = arith.cmpi eq, %35, %38 : vector<16x128xi32>
    %c0_i32_13 = arith.constant 0 : i32
    %40 = arith.cmpi sgt, %arg1, %c0_i32_13 : i32
    %41 = arith.extui %40 : i1 to i32
    %c0_i32_14 = arith.constant 0 : i32
    %42 = arith.cmpi ne, %41, %c0_i32_14 : i32
    scf.if %42 {
      %c1_i32_30 = arith.constant 1 : i32
      %71 = arith.subi %0, %c1_i32_30 : i32
      %c0_i32_31 = arith.constant 0 : i32
      %c0_i32_32 = arith.constant 0 : i32
      %c0_i32_33 = arith.constant 0 : i32
      %72 = tpu.memref_slice %arg3[%arg0, %71, %c0_i32_33] : memref<1x32x128xf32, #tpu.memory_space<any>> -> memref<1x1x128xf32, #tpu.memory_space<any>>
      %73 = tpu.memref_squeeze %72 : memref<1x1x128xf32, #tpu.memory_space<any>> -> memref<1x128xf32, #tpu.memory_space<any>>
      %c0_i32_34 = arith.constant 0 : i32
      %c0_i32_35 = arith.constant 0 : i32
      %74 = tpu.memref_slice %arg5[%c0_i32_31, %c0_i32_34, %c0_i32_35] : memref<2x1x128xf32, #tpu.memory_space<vmem>> -> memref<1x1x128xf32, #tpu.memory_space<vmem>>
      %75 = tpu.memref_squeeze %74 : memref<1x1x128xf32, #tpu.memory_space<vmem>> -> memref<1x128xf32, #tpu.memory_space<vmem>>
      %76 = tpu.memref_slice %arg6[%c0_i32_32] : memref<2x!tpu.dma_semaphore, #tpu.memory_space<semaphore_mem>> -> memref<1x!tpu.dma_semaphore, #tpu.memory_space<semaphore_mem>>
      %77 = tpu.memref_squeeze %76 : memref<1x!tpu.dma_semaphore, #tpu.memory_space<semaphore_mem>> -> memref<!tpu.dma_semaphore, #tpu.memory_space<semaphore_mem>>
      tpu.wait_dma2 semaphore(%77 : memref<!tpu.dma_semaphore, #tpu.memory_space<semaphore_mem>>) src(%73 : memref<1x128xf32, #tpu.memory_space<any>>) dst(%75 : memref<1x128xf32, #tpu.memory_space<vmem>>)
    } else {
    }
    %c1_i32_15 = arith.constant 1 : i32
    %43 = arith.cmpi slt, %arg1, %c1_i32_15 : i32
    %44 = arith.extui %43 : i1 to i32
    %c0_i32_16 = arith.constant 0 : i32
    %45 = arith.cmpi ne, %44, %c0_i32_16 : i32
    scf.if %45 {
      %c16_i32_30 = arith.constant 16 : i32
      %71 = arith.addi %0, %c16_i32_30 : i32
      %c1_i32_31 = arith.constant 1 : i32
      %c1_i32_32 = arith.constant 1 : i32
      %c0_i32_33 = arith.constant 0 : i32
      %72 = tpu.memref_slice %arg3[%arg0, %71, %c0_i32_33] : memref<1x32x128xf32, #tpu.memory_space<any>> -> memref<1x1x128xf32, #tpu.memory_space<any>>
      %73 = tpu.memref_squeeze %72 : memref<1x1x128xf32, #tpu.memory_space<any>> -> memref<1x128xf32, #tpu.memory_space<any>>
      %c0_i32_34 = arith.constant 0 : i32
      %c0_i32_35 = arith.constant 0 : i32
      %74 = tpu.memref_slice %arg5[%c1_i32_31, %c0_i32_34, %c0_i32_35] : memref<2x1x128xf32, #tpu.memory_space<vmem>> -> memref<1x1x128xf32, #tpu.memory_space<vmem>>
      %75 = tpu.memref_squeeze %74 : memref<1x1x128xf32, #tpu.memory_space<vmem>> -> memref<1x128xf32, #tpu.memory_space<vmem>>
      %76 = tpu.memref_slice %arg6[%c1_i32_32] : memref<2x!tpu.dma_semaphore, #tpu.memory_space<semaphore_mem>> -> memref<1x!tpu.dma_semaphore, #tpu.memory_space<semaphore_mem>>
      %77 = tpu.memref_squeeze %76 : memref<1x!tpu.dma_semaphore, #tpu.memory_space<semaphore_mem>> -> memref<!tpu.dma_semaphore, #tpu.memory_space<semaphore_mem>>
      tpu.wait_dma2 semaphore(%77 : memref<!tpu.dma_semaphore, #tpu.memory_space<semaphore_mem>>) src(%73 : memref<1x128xf32, #tpu.memory_space<any>>) dst(%75 : memref<1x128xf32, #tpu.memory_space<vmem>>)
    } else {
    }
    %c1_i32_17 = arith.constant 1 : i32
    %46 = tpu.dynamic_rotate %8 by %c1_i32_17 dim 0 : vector<16x128xf32>, i32 -> vector<16x128xf32>
    %c0_18 = arith.constant 0 : index
    %c0_19 = arith.constant 0 : index
    %c0_20 = arith.constant 0 : index
    %47 = vector.load %arg5[%c0_18, %c0_19, %c0_20] : memref<2x1x128xf32, #tpu.memory_space<vmem>>, vector<1x1x128xf32>
    %48 = vector.shape_cast %47 : vector<1x1x128xf32> to vector<1x128xf32>
    %49 = vector.shape_cast %48 : vector<1x128xf32> to vector<1x128xf32>
    %50 = vector.broadcast %49 : vector<1x128xf32> to vector<16x128xf32>
    %51 = arith.select %31, %50, %46 : vector<16x128xi1>, vector<16x128xf32>
    %cst_21 = arith.constant 1.000000e+00 : f32
    %52 = vector.broadcast %cst_21 : f32 to vector<16x128xf32>
    %53 = arith.select %37, %52, %51 : vector<16x128xi1>, vector<16x128xf32>
    %c15_i32_22 = arith.constant 15 : i32
    %54 = tpu.dynamic_rotate %8 by %c15_i32_22 dim 0 : vector<16x128xf32>, i32 -> vector<16x128xf32>
    %c1 = arith.constant 1 : index
    %c0_23 = arith.constant 0 : index
    %c0_24 = arith.constant 0 : index
    %55 = vector.load %arg5[%c1, %c0_23, %c0_24] : memref<2x1x128xf32, #tpu.memory_space<vmem>>, vector<1x1x128xf32>
    %56 = vector.shape_cast %55 : vector<1x1x128xf32> to vector<1x128xf32>
    %57 = vector.shape_cast %56 : vector<1x128xf32> to vector<1x128xf32>
    %58 = vector.broadcast %57 : vector<1x128xf32> to vector<16x128xf32>
    %59 = arith.select %33, %58, %54 : vector<16x128xi1>, vector<16x128xf32>
    %cst_25 = arith.constant 2.500000e-01 : f32
    %60 = vector.broadcast %cst_25 : f32 to vector<16x128xf32>
    %61 = arith.select %39, %60, %59 : vector<16x128xi1>, vector<16x128xf32>
    %62 = arith.addf %53, %61 : vector<16x128xf32>
    %cst_26 = arith.constant 5.000000e-01 : f32
    %63 = vector.broadcast %cst_26 : f32 to vector<16x128xf32>
    %64 = arith.mulf %63, %62 : vector<16x128xf32>
    %65 = arith.addf %10, %10 : vector<16x128xf32>
    %66 = arith.addf %64, %65 : vector<16x128xf32>
    %67 = arith.addf %28, %66 : vector<16x128xf32>
    %c0_27 = arith.constant 0 : index
    %c0_28 = arith.constant 0 : index
    %c0_29 = arith.constant 0 : index
    %68 = vector.load %arg4[%c0_27, %c0_28, %c0_29] : memref<1x16x128xf32, #tpu.memory_space<vmem>>, vector<1x16x128xf32>
    %69 = vector.shape_cast %68 : vector<1x16x128xf32> to vector<16x128xf32>
    %70 = vector.shape_cast %67 : vector<16x128xf32> to vector<1x16x128xf32>
    tpu.vector_store %arg4[%c0_27, %c0_28, %c0_29], %70 {strides = array<i32>} : memref<1x16x128xf32, #tpu.memory_space<vmem>>, vector<1x16x128xf32>,
    return
  }
  func.func @transform_0(%arg0: i32, %arg1: i32) -> (i32, i32, i32) {
    %c0_i32 = arith.constant 0 : i32
    %c0_i32_0 = arith.constant 0 : i32
    return %arg0, %arg1, %c0_i32 : i32, i32, i32
  }
  func.func @transform_2(%arg0: i32, %arg1: i32) -> (i32, i32, i32) {
    %c0_i32 = arith.constant 0 : i32
    %c0_i32_0 = arith.constant 0 : i32
    return %arg0, %arg1, %c0_i32 : i32, i32, i32
  }
}

</mosaic_0001>

<llo_original>
// kernel: tpu_custom_call.1
$region0: #{tpu_custom_call.1}
  #allocation0 [shape = 'u32[]', space=smem, size = 0x4, offset = 0x4, fixed_abs, tag = 'smem constant byte address 0x4 - core index']
  #allocation1 [shape = 'u32[72,128]{1,0:T(1,128)}', space=vmem, size = 0x9000, scoped, tag = 'internal scratch']
  #allocation2 [shape = 'f32[2,1,128]{2,1,0:T(1,128)}', space=vmem, size = 0x400, scoped, tag = 'scratch operand']
  #allocation3 [shape = 's32[2]{0}', space=sflag, size = 0x8, scoped, tag = 'scratch operand']
  #allocation8 [shape = 's32[]', space=sflag, size = 0x4, offset = 0, fixed_abs, tag = 'sflag constant byte address 0x0 - dummy sync flag']
  #allocation9 [shape = 's32[]', space=sflag, size = 0x4, offset = 0, fixed_abs, tag = 'sflag constant byte address 0x0 - dummy sync flag']
  #allocation10 [shape = 'u32[]', space=smem, size = 0x4, offset = 0x44, fixed_abs, tag = 'smem constant byte address 0x44 - assertion arg 0']
  #allocation11 [shape = 'u32[]', space=smem, size = 0x4, offset = 0x48, fixed_abs, tag = 'smem constant byte address 0x48 - assertion arg 1']
  #allocation12 [shape = 's32[]', space=sflag, size = 0x4, offset = 0, fixed_abs, tag = 'sflag constant byte address 0x0 - dummy sync flag']
  #allocation13 [shape = 's32[]', space=sflag, size = 0x4, offset = 0, fixed_abs, tag = 'sflag constant byte address 0x0 - dummy sync flag']
  %s0 = inlined_call_operand.hbm [shape: f32[1,32,128], index: 0, kind: input, shape index: {}]
  %s1 = inlined_call_operand.hbm [shape: f32[1,32,128], index: 1, kind: input, shape index: {}]
  %s2 = inlined_call_operand.hbm [shape: f32[1,32,128], index: 2, kind: output, shape index: {}]
  %s3 = sld [smem:[#allocation0]]
  $region65: #{tpu_custom_call.1} parent=0
    _
  %s5 = ssub.s32 1, %s3
  %s6 = scalar_select 0, %s5, %s3
  $region1: #{tpu_custom_call.1} parent=0
    #allocation4 [shape = 'u8[16384]{0}', space=vmem, size = 0x4000, scoped, tag = 'input window, operand 0']
    #allocation5 [shape = 's32[2]{0}', space=sflag, size = 0x8, scoped, tag = 'scoped memory for tpu_custom_call.1']
    #allocation6 [shape = 's32[2]{0}', space=sflag, size = 0x8, scoped, tag = 'scoped memory for tpu_custom_call.1']
    #allocation7 [shape = 'u8[16384]{0}', space=vmem, size = 0x4000, scoped, tag = 'output window, operand 0']
    %7 = vsyncpa [#allocation5], 0
    %s8 = scalar_lea.sflag [#allocation5], 1
    %9 = vsyncpa %s8, 0
    %10 = vsyncpa [#allocation6], 0
    %s11 = scalar_lea.sflag [#allocation6], 1
    %12 = vsyncpa %s11, 0
    loop: start=0, step=1, limit=4
    $region2: #{tpu_custom_call.1} parent=1 // loop_pre_header
      _
    $region3: #{tpu_custom_call.1} parent=1 // loop_header
      %s14 = sphi 0, %s18
      %p15 = scmp.ge.s32.totalorder %s14, 4
      %s21 = sphi 0, %s33
      %s22 = sphi 0, %s29
      %s23 = sphi 0, %s21
      %s24 = sphi 0, %s22
      %s25 = sphi 0, %s23
      %s26 = sphi 0, %s24
      %s38 = sphi 0, %s40
      %s41 = sphi 0, %s38
      %s42 = sphi 0, %s41
      %s58 = sphi 0, %s42
      %s66 = sphi 0, %s68
      %s69 = sphi 0, %s66
      %s70 = sphi 0, %s69
      %s86 = sphi 0, %s70
    $region4: #{tpu_custom_call.1} parent=1 // loop_header_branch
      %17 = sbr.rel (%p15) target = $region8
    $region5: #{tpu_custom_call.1} parent=1 // loop_body
      %s19 = ssub.s32 %s14, 1
      %s20 = ssub.s32 %s14, 2
      %s27 = sadd.s32 1, %s22
      %p28 = scmp.ge.s32.totalorder %s27, 2
      %s29 = scalar_select %p28, 0, %s27
      %s30 = sadd.s32 1, %s21
      %s31 = scalar_select %p28, %s30, %s21
      %p32 = scmp.ge.s32.totalorder %s31, 1
      %s33 = scalar_select %p32, 0, %s31
      %s34 = ssub.s32 %s21, %s33
      %s35 = ssub.s32 %s22, %s29
      %s36 = sor.u32 %s34, %s35
      %p37 = scmp.eq.s32.totalorder %s36, 0
      %s39 = sadd.s32 %s38, 1
      %s40 = scalar_select %p37, %s38, %s39
      %p43 = pneg %p37
      %p44 = scmp.eq.s32.totalorder %s14, 1
      %p45 = por %p43, %p44
      %p46 = scmp.ne.s32.totalorder %s38, %s41
      %p47 = scmp.eq.s32.totalorder %s14, 0
      %p48 = por %p46, %p47
      %p49 = scmp.ne.s32.totalorder %s38, %s41
      %p50 = scmp.eq.s32.totalorder %s19, 1
      %p51 = por %p49, %p50
      %p52 = scmp.ne.s32.totalorder %s41, %s42
      %p53 = scmp.eq.s32.totalorder %s19, 0
      %p54 = por %p52, %p53
      %p55 = scmp.ne.s32.totalorder %s41, %s42
      %p56 = scmp.eq.s32.totalorder %s20, 1
      %p57 = por %p55, %p56
      %p59 = scmp.ne.s32.totalorder %s42, %s58
      %p60 = scmp.eq.s32.totalorder %s20, 0
      %p61 = por %p59, %p60
      %s62 = ssub.s32 %s21, %s33
      %s63 = ssub.s32 %s22, %s29
      %s64 = sor.u32 %s62, %s63
      %p65 = scmp.eq.s32.totalorder %s64, 0
      %s67 = sadd.s32 %s66, 1
      %s68 = scalar_select %p65, %s66, %s67
      %p71 = pneg %p65
      %p72 = scmp.eq.s32.totalorder %s14, 1
      %p73 = por %p71, %p72
      %p74 = scmp.ne.s32.totalorder %s66, %s69
      %p75 = scmp.eq.s32.totalorder %s14, 0
      %p76 = por %p74, %p75
      %p77 = scmp.ne.s32.totalorder %s66, %s69
      %p78 = scmp.eq.s32.totalorder %s19, 1
      %p79 = por %p77, %p78
      %p80 = scmp.ne.s32.totalorder %s69, %s70
      %p81 = scmp.eq.s32.totalorder %s19, 0
      %p82 = por %p80, %p81
      %p83 = scmp.ne.s32.totalorder %s69, %s70
      %p84 = scmp.eq.s32.totalorder %s20, 1
      %p85 = por %p83, %p84
      %p87 = scmp.ne.s32.totalorder %s70, %s86
      %p88 = scmp.eq.s32.totalorder %s20, 0
      %p89 = por %p87, %p88
      %p90 = scmp.le.s32.totalorder 1, %s14
      %p91 = scmp.lt.s32.totalorder %s14, 3
      %p92 = pnand %p90, %p91
      %p93 = pneg %p92
      // Predicated region
      $region9: #{tpu_custom_call.1} parent=5 // pred_check
        _
      $region10: #{tpu_custom_call.1} parent=5 // pred_check_branch
        %95 = sbr.rel (%p92) target = $region12
      $region11: #{tpu_custom_call.1} parent=5 // pred_region
        %s96 = ssub.s32 %s14, 1
      $region12: #{tpu_custom_call.1} parent=5 // pred_fallthru
        _
      %p97 = scmp.lt.s32.totalorder %s14, 2
      // Predicated region
      $region13: #{tpu_custom_call.1} parent=5 // pred_check
        %p98 = pneg %p97
      $region14: #{tpu_custom_call.1} parent=5 // pred_check_branch
        %100 = sbr.rel (%p98) target = $region16
      $region15: #{tpu_custom_call.1} parent=5 // pred_region
        // Predicated region
        $region17: #{tpu_custom_call.1} parent=15 // pred_check
          %p101 = pneg %p48
        $region18: #{tpu_custom_call.1} parent=15 // pred_check_branch
          %103 = sbr.rel (%p101) target = $region20
        $region19: #{tpu_custom_call.1} parent=15 // pred_region
          %s104 = sand.u32 %s38, 1
          %s105 = scalar_lea.sflag [#allocation5], %s104
          %s106 = sand.u32 %s38, 1
          %s107 = smul.addr %s106, 16
          %s108 = scalar_lea.vmem [#allocation4], %s107
          %s109 = smul.u32 2, %s22
          %111 = vsyncadd %s105, 0
          %s112 = smul.addr %s21, 4
          %s113 = sadd.s32 %s109, %s112
          %s114 = smul.addr %s113, 8
          %s115 = scalar_lea.hbm %s0, %s114
          %s116 = sshll.u32 %s115, 4
          %s117 = int_to_ptr.hbm [resolvable:$true] %s116
          %s118 = sshll.u32 %s108, 4
          %s119 = int_to_ptr.vmem [resolvable:$true] %s118
          %124 = dma.hbm_to_vmem [thread:$0]  %s117, 256, %s119, %s105, 128, 128, 8
        $region20: #{tpu_custom_call.1} parent=15 // pred_fallthru
          _
      $region16: #{tpu_custom_call.1} parent=5 // pred_fallthru
        _
      %p125 = scmp.le.s32.totalorder 1, %s14
      %p126 = scmp.lt.s32.totalorder %s14, 3
      %p127 = pnand %p125, %p126
      %p128 = pneg %p127
      // Predicated region
      $region21: #{tpu_custom_call.1} parent=5 // pred_check
        _
      $region22: #{tpu_custom_call.1} parent=5 // pred_check_branch
        %130 = sbr.rel (%p127) target = $region24
      $region23: #{tpu_custom_call.1} parent=5 // pred_region
        %s131 = ssub.s32 %s14, 1
        %s132 = sand.u32 %s41, 1
        %s133 = scalar_lea.sflag [#allocation5], %s132
        %s134 = sand.u32 %s41, 1
        %s135 = smul.addr %s134, 16
        %s136 = scalar_lea.vmem [#allocation4], %s135
        // Predicated region
        $region25: #{tpu_custom_call.1} parent=23 // pred_check
          %p137 = pneg %p54
        $region26: #{tpu_custom_call.1} parent=23 // pred_check_branch
          %139 = sbr.rel (%p137) target = $region28
        $region27: #{tpu_custom_call.1} parent=23 // pred_region
          %141 = dma.done %s133, 256
        $region28: #{tpu_custom_call.1} parent=23 // pred_fallthru
          _
        %s142 = sand.u32 %s41, 1
        %s143 = scalar_lea.sflag [#allocation5], %s142
        %s144 = sand.u32 %s41, 1
        %s145 = smul.addr %s144, 16
        %s146 = scalar_lea.vmem [#allocation4], %s145
        %p147 = pneg %p54
        %p148 = pneg %p51
        %p149 = pneg %p82
        %p150 = pneg %p79
        %s151 = sand.u32 %s69, 1
        %s152 = scalar_lea.sflag [#allocation6], %s151
        %s153 = sand.u32 %s69, 1
        %s154 = smul.addr %s153, 16
        %s155 = scalar_lea.vmem [#allocation7], %s154
        %s156 = smul.u32 2, %s24
        %s157 = smul.u32 2, %s24
        %s158 = smul.u32 %s24, 16
        %p159 = scmp.gt.s32.totalorder %s24, 0
        // Predicated region
        $region29: #{tpu_custom_call.1} parent=23 // pred_check
          %p160 = pneg %p159
        $region30: #{tpu_custom_call.1} parent=23 // pred_check_branch
          %162 = sbr.rel (%p160) target = $region32
        $region31: #{tpu_custom_call.1} parent=23 // pred_region
          %s163 = ssub.s32 %s158, 1
          %s164 = smul.u32 %s23, 32
          %s165 = sadd.s32 %s163, %s164
          %s166 = scalar_lea.hbm %s1, %s165
          // Predicated region
          $region33: #{tpu_custom_call.1} parent=31 // pred_check
            _
          $region34: #{tpu_custom_call.1} parent=31 // pred_check_branch
            %168 = sbr.rel target = $region36
          $region35: #{tpu_custom_call.1} parent=31 // pred_region
            %169 = sst [smem:[#allocation10]] [#allocation9]
            %170 = sst [smem:[#allocation11]] [#allocation8]
          $region36: #{tpu_custom_call.1} parent=31 // pred_fallthru
            _
          %172 = shalt.err (0)
          %s174 = sshll.u32 %s166, 4
          %s175 = int_to_ptr.hbm [resolvable:$true] %s174
          %s176 = sshll.u32 [#allocation2], 4
          %s177 = int_to_ptr.vmem [resolvable:$true] %s176
          %179 = dma.hbm_to_vmem [thread:$0]  %s175, 16, %s177, [#allocation3]
        $region32: #{tpu_custom_call.1} parent=23 // pred_fallthru
          _
        %p180 = scmp.lt.s32.totalorder %s24, 1
        // Predicated region
        $region37: #{tpu_custom_call.1} parent=23 // pred_check
          %p181 = pneg %p180
        $region38: #{tpu_custom_call.1} parent=23 // pred_check_branch
          %183 = sbr.rel (%p181) target = $region40
        $region39: #{tpu_custom_call.1} parent=23 // pred_region
          %s184 = sadd.s32 %s158, 16
          %s185 = smul.u32 %s23, 32
          %s186 = sadd.s32 %s184, %s185
          %s187 = scalar_lea.hbm %s1, %s186
          %s188 = scalar_lea.vmem [#allocation2], 1
          %s189 = scalar_lea.sflag [#allocation3], 1
          // Predicated region
          $region41: #{tpu_custom_call.1} parent=39 // pred_check
            _
          $region42: #{tpu_custom_call.1} parent=39 // pred_check_branch
            %191 = sbr.rel target = $region44
          $region43: #{tpu_custom_call.1} parent=39 // pred_region
            %192 = sst [smem:[#allocation10]] [#allocation13]
            %193 = sst [smem:[#allocation11]] [#allocation12]
          $region44: #{tpu_custom_call.1} parent=39 // pred_fallthru
            _
          %195 = shalt.err (0)
          %s197 = sshll.u32 %s187, 4
          %s198 = int_to_ptr.hbm [resolvable:$true] %s197
          %s199 = sshll.u32 %s188, 4
          %s200 = int_to_ptr.vmem [resolvable:$true] %s199
          %202 = dma.hbm_to_vmem [thread:$0]  %s198, 16, %s200, %s189
        $region40: #{tpu_custom_call.1} parent=23 // pred_fallthru
          _
        %v203 = vld [vmem:[%s136] sm:$0xff]
        %v204 = vld [vmem:[%s136 + $0x8] sm:$0xff]
        %v205 = vmul.f32 %v203, -0.5
        %v206 = vmul.f32 %v204, -0.5
        %v207 = vlaneseq
        %v208 = vand.u32 %v207, 127
        %vm209 = vcmp.eq.s32.totalorder %v208, 0
        %vm210 = vcmp.eq.s32.totalorder %v208, 127
        %211 = vrot.lane.b32.xlu0 %v203, 1
        %v212 = vpop.permute.xlu0 %211
        %213 = vrot.lane.b32.xlu0 %v204, 1
        %v214 = vpop.permute.xlu0 %213
        %v215 = vmul.f32 %v212, 0.5
        %v216 = vmul.f32 %v214, 0.5
        %v217 = vadd.f32 %v215, %v205
        %v218 = vadd.f32 %v216, %v206
        %v219 = vsel %vm209, 0.125, %v217
        %v220 = vsel %vm209, 0.125, %v218
        %221 = vrot.lane.b32.xlu0 %v203, 127
        %v222 = vpop.permute.xlu0 %221
        %223 = vrot.lane.b32.xlu0 %v204, 127
        %v224 = vpop.permute.xlu0 %223
        %v225 = vmul.f32 %v222, 0.5
        %v226 = vmul.f32 %v224, 0.5
        %v227 = vadd.f32 %v225, %v205
        %v228 = vadd.f32 %v226, %v206
        %v229 = vsel %vm210, -0.125, %v227
        %v230 = vsel %vm210, -0.125, %v228
        %v231 = vadd.f32 %v219, %v229
        %v232 = vadd.f32 %v220, %v230
        %v233 = vlaneseq
        %v234 = vshrl.u32 %v233, 7
        %v235 = vadd.s32 %v234, 8
        %vm236 = vcmp.eq.s32.totalorder %v234, 0
        %vm237 = vcmp.eq.s32.totalorder %v235, 0
        %vm238 = vcmp.eq.s32.totalorder %v234, 15
        %vm239 = vcmp.eq.s32.totalorder %v235, 15
        %v240 = vstv %s158
        %v241 = vadd.s32 %v234, %v240
        %v242 = vadd.s32 %v235, %v240
        %vm243 = vcmp.eq.s32.totalorder %v241, 0
        %vm244 = vcmp.eq.s32.totalorder %v242, 0
        %vm245 = vcmp.eq.s32.totalorder %v241, 31
        %vm246 = vcmp.eq.s32.totalorder %v242, 31
        // Predicated region
        $region45: #{tpu_custom_call.1} parent=23 // pred_check
          %p247 = pneg %p159
        $region46: #{tpu_custom_call.1} parent=23 // pred_check_branch
          %249 = sbr.rel (%p247) target = $region48
        $region47: #{tpu_custom_call.1} parent=23 // pred_region
          %s250 = smul.u32 1, 1
          %s251 = sshll.u32 %s250, 4
          %252 = dma.done [#allocation3], %s251
        $region48: #{tpu_custom_call.1} parent=23 // pred_fallthru
          _
        // Predicated region
        $region49: #{tpu_custom_call.1} parent=23 // pred_check
          %p253 = pneg %p180
        $region50: #{tpu_custom_call.1} parent=23 // pred_check_branch
          %255 = sbr.rel (%p253) target = $region52
        $region51: #{tpu_custom_call.1} parent=23 // pred_region
          %s256 = scalar_lea.sflag [#allocation3], 1
          %s257 = smul.u32 1, 1
          %s258 = sshll.u32 %s257, 4
          %259 = dma.done %s256, %s258
        $region52: #{tpu_custom_call.1} parent=23 // pred_fallthru
          _
        %v260 = vrot.slane %v203, 7
        %v261 = vrot.slane %v204, 7
        %vm262 = vcmp.lt.s32.totalorder %v234, 1
        %v263 = vsel %vm262, %v260, %v261
        %v264 = vsel %vm262, %v261, %v260
        %v265 = vld [vmem:[#allocation2] sm:$0x1]
        %v267 = vperm.slane %v265, 0
        %v269 = vsel %vm236, %v267, %v264
        %v270 = vsel %vm237, %v267, %v263
        %v271 = vsel %vm243, 1.0, %v269
        %v272 = vsel %vm244, 1.0, %v270
        %v273 = vrot.slane %v203, 1
        %v274 = vrot.slane %v204, 1
        %vm275 = vcmp.lt.s32.totalorder %v234, 7
        %v276 = vsel %vm275, %v273, %v274
        %v277 = vsel %vm275, %v274, %v273
        %s278 = scalar_lea.vmem [#allocation2], 1
        %v279 = vld [vmem:[%s278] sm:$0x1]
        %v281 = vperm.slane %v279, 0
        %v283 = vsel %vm238, %v281, %v276
        %v284 = vsel %vm239, %v281, %v277
        %v285 = vsel %vm245, 0.25, %v283
        %v286 = vsel %vm246, 0.25, %v284
        %v287 = vadd.f32 %v271, %v285
        %v288 = vadd.f32 %v272, %v286
        %v289 = vmul.f32 %v287, 0.5
        %v290 = vmul.f32 %v288, 0.5
        %v291 = vadd.f32 %v205, %v205
        %v292 = vadd.f32 %v206, %v206
        %v293 = vadd.f32 %v289, %v291
        %v294 = vadd.f32 %v290, %v292
        %v295 = vadd.f32 %v231, %v293
        %v296 = vadd.f32 %v232, %v294
        %297 = vst [vmem:[%s155] sm:$0xff] %v295
        %298 = vst [vmem:[%s155 + $0x8] sm:$0xff] %v296
        %s299 = sand.u32 %s69, 1
        %s300 = scalar_lea.sflag [#allocation6], %s299
        %s301 = sand.u32 %s69, 1
        %s302 = smul.addr %s301, 16
        %s303 = scalar_lea.vmem [#allocation7], %s302
        // Predicated region
        $region53: #{tpu_custom_call.1} parent=23 // pred_check
          %p304 = pneg %p79
        $region54: #{tpu_custom_call.1} parent=23 // pred_check_branch
          %306 = sbr.rel (%p304) target = $region56
        $region55: #{tpu_custom_call.1} parent=23 // pred_region
          %s307 = smul.u32 2, %s24
          %309 = vsyncadd %s300, 0
          %s310 = smul.addr %s23, 4
          %s311 = sadd.s32 %s307, %s310
          %s312 = smul.addr %s311, 8
          %s313 = scalar_lea.hbm %s2, %s312
          %s314 = sshll.u32 %s303, 4
          %s315 = int_to_ptr.vmem [resolvable:$true] %s314
          %s316 = sshll.u32 %s313, 4
          %s317 = int_to_ptr.hbm [resolvable:$true] %s316
          %322 = dma.vmem_to_hbm [thread:$0]  %s315, 256, %s317, %s300, 128, 128, 8
        $region56: #{tpu_custom_call.1} parent=23 // pred_fallthru
          _
      $region24: #{tpu_custom_call.1} parent=5 // pred_fallthru
        _
      %p323 = scmp.le.s32.totalorder 2, %s14
      // Predicated region
      $region57: #{tpu_custom_call.1} parent=5 // pred_check
        %p324 = pneg %p323
      $region58: #{tpu_custom_call.1} parent=5 // pred_check_branch
        %326 = sbr.rel (%p324) target = $region60
      $region59: #{tpu_custom_call.1} parent=5 // pred_region
        %s327 = ssub.s32 %s14, 2
        // Predicated region
        $region61: #{tpu_custom_call.1} parent=59 // pred_check
          %p328 = pneg %p85
        $region62: #{tpu_custom_call.1} parent=59 // pred_check_branch
          %330 = sbr.rel (%p328) target = $region64
        $region63: #{tpu_custom_call.1} parent=59 // pred_region
          %s331 = sand.u32 %s70, 1
          %s332 = scalar_lea.sflag [#allocation6], %s331
          %s333 = sand.u32 %s70, 1
          %s334 = smul.addr %s333, 16
          %s335 = scalar_lea.vmem [#allocation7], %s334
          %337 = dma.done %s332, 256
        $region64: #{tpu_custom_call.1} parent=59 // pred_fallthru
          _
      $region60: #{tpu_custom_call.1} parent=5 // pred_fallthru
        _
    $region6: #{tpu_custom_call.1} parent=1 // loop_footer
      %s18 = sadd.s32 1, %s14
    $region7: #{tpu_custom_call.1} parent=1 // loop_footer_branch
      %13 = sbr.rel target = $region3
    $region8: #{tpu_custom_call.1} parent=1 // loop_exit
      _
    %338 = vsyncpa [#allocation5], 1
    %s339 = scalar_lea.sflag [#allocation5], 1
    %340 = vsyncpa %s339, 1
    %341 = vsyncpa [#allocation6], 1
    %s342 = scalar_lea.sflag [#allocation6], 1
    %343 = vsyncpa %s342, 1
  %344 = vsyncmov [#allocation3]
  %s345 = vpop.sfrf %344
  %p346 = scmp.eq.s32.totalorder %s345, 0
  %p347 = pneg %p346
  %349 = shalt.err (%p347)
  %s350 = scalar_lea.sflag [#allocation3], 1
  %351 = vsyncmov %s350
  %s352 = vpop.sfrf %351
  %p353 = scmp.eq.s32.totalorder %s352, 0
  %p354 = pneg %p353
  %356 = shalt.err (%p354)

</llo_original>
